<compile_context>
chip_gen: v7x
topology: tpu7x:2x2x1
jax: 0.10.0
libtpu: 0.0.40
codegen_flags: <defaults>
</compile_context>

<pallas_src>
import jax
import jax.numpy as jnp
from jax import lax
from jax.experimental import pallas as pl
from jax.experimental.pallas import tpu as pltpu

KH = KW = 3                       # conv kernel size
PAD = 2                           # padding
H_IN = W_IN = 3                   # spatial size of input
W_PAD_IN = W_IN + 2 * PAD         # 7  (only W is pre-padded; H pad folded into assembly)
H_OUT = H_IN + 2 * PAD - KH + 1   # 5
W_OUT = W_IN + 2 * PAD - KW + 1   # 5
LANES = 128
MAX_N_TILE = 8192                 # lane-dense tile cap (~3 MiB VMEM incl. double-buffering,
                                  # safe for v5e/v6e 32 MiB and v7x 32 MiB scoped defaults)


def conv_tanh_kernel(x_ref, w_ref, o_ref):
    """x_ref: (3, 7, NT) f32 VMEM (W pre-padded by 2, batch on lanes),
    w_ref: (9,) f32 SMEM, o_ref: (5, 5, NT) f32 VMEM."""
    # The 3 W-shifted views of the input: one static-offset ref slice per kw,
    # each reused across the 3 kernel rows.  No scratch, no memset, no store->load.
    xs = [x_ref[:, kw:kw + W_OUT, :] for kw in range(KW)]          # each (3, 5, NT)

    # Per-kernel-row 1-D convs along W: t[kh] = sum_kw w[kh, kw] * xs[kw].
    # Pure scalar x vector FMAs on register-resident (3, 5, NT) slabs (VPU only).
    t = []
    for kh in range(KH):
        acc = w_ref[kh * KW + 0] * xs[0]
        acc = acc + w_ref[kh * KW + 1] * xs[1]
        acc = acc + w_ref[kh * KW + 2] * xs[2]
        t.append(acc)

    # H-padding folded statically into the output-row assembly:
    #   out[oh] = sum over kh with ih = oh + kh - PAD in [0, H_IN) of t[kh][ih].
    for oh in range(H_OUT):
        row = None
        for kh in range(KH):
            ih = oh + kh - PAD
            if 0 <= ih < H_IN:
                term = t[kh][ih]                                   # (5, NT): outer-dim select
                row = term if row is None else row + term
        o_ref[oh, :, :] = jnp.tanh(row)                            # f32 EUP; lane-dense store


@jax.jit
def model_tanh_forward(x_nchw, weight_oihw):
    """x_nchw: (N, 1, 3, 3) f32; weight_oihw: (1, 1, 3, 3) f32 -> (N, 1, 5, 5) f32."""
    n = x_nchw.shape[0]
    # Lane-dense batch tiling: round N up to a multiple of 128 (and of the tile size).
    n_tile = min(MAX_N_TILE, -(-n // LANES) * LANES)
    n_pad = -(-n // n_tile) * n_tile
    # TODO(synk): for very large N that is not a multiple of MAX_N_TILE, use a pl.cdiv
    # grid with a masked tail instead of rounding n_pad up to a full tile.

    # Layout plumbing only (single fused XLA op chain).  At this size these transposes,
    # not the kernel, dominate wall clock — benchmark the whole jit, not the pallas_call.
    x_hwn = jnp.transpose(x_nchw[:, 0, :, :], (1, 2, 0))              # (3, 3, n)
    x_hwn = jnp.pad(x_hwn, ((0, 0), (PAD, PAD), (0, n_pad - n)))      # (3, 7, n_pad)
    w_flat = weight_oihw.reshape(KH * KW)                             # (9,) -> 64 B of SMEM

    out_hwn = pl.pallas_call(
        conv_tanh_kernel,
        out_shape=jax.ShapeDtypeStruct((H_OUT, W_OUT, n_pad), jnp.float32),
        grid=(n_pad // n_tile,),
        in_specs=[
            pl.BlockSpec((H_IN, W_PAD_IN, n_tile), lambda i: (0, 0, i)),   # VMEM input
            pl.BlockSpec(memory_space=pltpu.MemorySpace.SMEM),             # (9,) weights
        ],
        out_specs=pl.BlockSpec((H_OUT, W_OUT, n_tile), lambda i: (0, 0, i)),
        compiler_params=pltpu.CompilerParams(
            dimension_semantics=("parallel",)),        # shards batch tiles across v7x's 2 TCs
    )(x_hwn, w_flat)

    # Restore NCHW with the single output channel; drop the batch lane padding.
    return jnp.transpose(out_hwn[:, :, :n], (2, 0, 1))[:, None, :, :]


def reference_forward(x_nchw, weight_oihw):
    """Pure-JAX reference (lax conv, NCHW/OIHW) for correctness checking."""
    y = lax.conv_general_dilated(
        x_nchw, weight_oihw,
        window_strides=(1, 1),
        padding=((PAD, PAD), (PAD, PAD)),
        dimension_numbers=("NCHW", "OIHW", "NCHW"),
    )
    return jnp.tanh(y)


if __name__ == "__main__":
    key = jax.random.PRNGKey(0)
    kx, kw_key = jax.random.split(key)

    N = 64
    x4 = jax.random.normal(kx, (N, 1, H_IN, W_IN), dtype=jnp.float32)

    # Deterministic Conv2d(1,1,3) weight init (kaiming-uniform bound = 1/sqrt(fan_in) = 1/3).
    bound = 1.0 / 3.0
    weight = jax.random.uniform(kw_key, (1, 1, KH, KW), dtype=jnp.float32,
                                minval=-bound, maxval=bound)

    out = jax.block_until_ready(model_tanh_forward(x4, weight))
    ref = jax.block_until_ready(reference_forward(x4, weight))

    assert out.shape == (N, 1, H_OUT, W_OUT), out.shape
    assert jnp.allclose(out, ref, atol=5e-5, rtol=1e-5), "mismatch vs reference conv+tanh"

    print("KERNEL_OK")
</pallas_src>

<mosaic_0001>
module attributes {stable_mosaic.version = 11 : i64} {
  func.func @conv_tanh_kernel(%arg0: i32, %arg1: memref<3x7x128xf32, #tpu.memory_space<vmem>>, %arg2: memref<9xf32, #tpu.memory_space<smem>>, %arg3: memref<5x5x128xf32, #tpu.memory_space<vmem>>) attributes {dimension_semantics = [#tpu.dimension_semantics<parallel>], iteration_bounds = array<i64: 1>, scalar_prefetch = 0 : i64, scratch_operands = 0 : i64, tpu.core_type = #tpu.core_type<tc>, window_params = [{transform_indices = @transform_0, window_bounds = array<i64: 3, 7, 128>}, {transform_indices = @transform_1, window_bounds = array<i64: 9>}, {transform_indices = @transform_2, window_bounds = array<i64: 5, 5, 128>}]} {
    %c0 = arith.constant 0 : index
    %c0_0 = arith.constant 0 : index
    %c0_1 = arith.constant 0 : index
    %0 = vector.load %arg1[%c0, %c0_0, %c0_1] : memref<3x7x128xf32, #tpu.memory_space<vmem>>, vector<3x5x128xf32>
    %c0_2 = arith.constant 0 : index
    %c1 = arith.constant 1 : index
    %c0_3 = arith.constant 0 : index
    %1 = vector.load %arg1[%c0_2, %c1, %c0_3] : memref<3x7x128xf32, #tpu.memory_space<vmem>>, vector<3x5x128xf32>
    %c0_4 = arith.constant 0 : index
    %c2 = arith.constant 2 : index
    %c0_5 = arith.constant 0 : index
    %2 = vector.load %arg1[%c0_4, %c2, %c0_5] : memref<3x7x128xf32, #tpu.memory_space<vmem>>, vector<3x5x128xf32>
    %c0_6 = arith.constant 0 : index
    %3 = memref.load %arg2[%c0_6] : memref<9xf32, #tpu.memory_space<smem>>
    %4 = vector.broadcast %3 : f32 to vector<3x5x128xf32>
    %5 = arith.mulf %4, %0 : vector<3x5x128xf32>
    %c1_7 = arith.constant 1 : index
    %6 = memref.load %arg2[%c1_7] : memref<9xf32, #tpu.memory_space<smem>>
    %7 = vector.broadcast %6 : f32 to vector<3x5x128xf32>
    %8 = arith.mulf %7, %1 : vector<3x5x128xf32>
    %9 = arith.addf %5, %8 : vector<3x5x128xf32>
    %c2_8 = arith.constant 2 : index
    %10 = memref.load %arg2[%c2_8] : memref<9xf32, #tpu.memory_space<smem>>
    %11 = vector.broadcast %10 : f32 to vector<3x5x128xf32>
    %12 = arith.mulf %11, %2 : vector<3x5x128xf32>
    %13 = arith.addf %9, %12 : vector<3x5x128xf32>
    %c3 = arith.constant 3 : index
    %14 = memref.load %arg2[%c3] : memref<9xf32, #tpu.memory_space<smem>>
    %15 = vector.broadcast %14 : f32 to vector<3x5x128xf32>
    %16 = arith.mulf %15, %0 : vector<3x5x128xf32>
    %c4 = arith.constant 4 : index
    %17 = memref.load %arg2[%c4] : memref<9xf32, #tpu.memory_space<smem>>
    %18 = vector.broadcast %17 : f32 to vector<3x5x128xf32>
    %19 = arith.mulf %18, %1 : vector<3x5x128xf32>
    %20 = arith.addf %16, %19 : vector<3x5x128xf32>
    %c5 = arith.constant 5 : index
    %21 = memref.load %arg2[%c5] : memref<9xf32, #tpu.memory_space<smem>>
    %22 = vector.broadcast %21 : f32 to vector<3x5x128xf32>
    %23 = arith.mulf %22, %2 : vector<3x5x128xf32>
    %24 = arith.addf %20, %23 : vector<3x5x128xf32>
    %c6 = arith.constant 6 : index
    %25 = memref.load %arg2[%c6] : memref<9xf32, #tpu.memory_space<smem>>
    %26 = vector.broadcast %25 : f32 to vector<3x5x128xf32>
    %27 = arith.mulf %26, %0 : vector<3x5x128xf32>
    %c7 = arith.constant 7 : index
    %28 = memref.load %arg2[%c7] : memref<9xf32, #tpu.memory_space<smem>>
    %29 = vector.broadcast %28 : f32 to vector<3x5x128xf32>
    %30 = arith.mulf %29, %1 : vector<3x5x128xf32>
    %31 = arith.addf %27, %30 : vector<3x5x128xf32>
    %c8 = arith.constant 8 : index
    %32 = memref.load %arg2[%c8] : memref<9xf32, #tpu.memory_space<smem>>
    %33 = vector.broadcast %32 : f32 to vector<3x5x128xf32>
    %34 = arith.mulf %33, %2 : vector<3x5x128xf32>
    %35 = arith.addf %31, %34 : vector<3x5x128xf32>
    %36 = vector.extract_strided_slice %35 {offsets = [0, 0, 0], sizes = [1, 5, 128], strides = [1, 1, 1]} : vector<3x5x128xf32> to vector<1x5x128xf32>
    %37 = vector.shape_cast %36 : vector<1x5x128xf32> to vector<5x128xf32>
    %38 = math.tanh %37 : vector<5x128xf32>
    %c0_9 = arith.constant 0 : index
    %c0_10 = arith.constant 0 : index
    %c0_11 = arith.constant 0 : index
    %39 = vector.load %arg3[%c0_9, %c0_10, %c0_11] : memref<5x5x128xf32, #tpu.memory_space<vmem>>, vector<1x5x128xf32>
    %40 = vector.shape_cast %39 : vector<1x5x128xf32> to vector<5x128xf32>
    %41 = vector.shape_cast %38 : vector<5x128xf32> to vector<1x5x128xf32>
    tpu.vector_store %arg3[%c0_9, %c0_10, %c0_11], %41 {strides = array<i32>} : memref<5x5x128xf32, #tpu.memory_space<vmem>>, vector<1x5x128xf32>,
    %42 = vector.extract_strided_slice %24 {offsets = [0, 0, 0], sizes = [1, 5, 128], strides = [1, 1, 1]} : vector<3x5x128xf32> to vector<1x5x128xf32>
    %43 = vector.shape_cast %42 : vector<1x5x128xf32> to vector<5x128xf32>
    %44 = vector.extract_strided_slice %35 {offsets = [1, 0, 0], sizes = [1, 5, 128], strides = [1, 1, 1]} : vector<3x5x128xf32> to vector<1x5x128xf32>
    %45 = vector.shape_cast %44 : vector<1x5x128xf32> to vector<5x128xf32>
    %46 = arith.addf %43, %45 : vector<5x128xf32>
    %47 = math.tanh %46 : vector<5x128xf32>
    %c1_12 = arith.constant 1 : index
    %c0_13 = arith.constant 0 : index
    %c0_14 = arith.constant 0 : index
    %48 = vector.load %arg3[%c1_12, %c0_13, %c0_14] : memref<5x5x128xf32, #tpu.memory_space<vmem>>, vector<1x5x128xf32>
    %49 = vector.shape_cast %48 : vector<1x5x128xf32> to vector<5x128xf32>
    %50 = vector.shape_cast %47 : vector<5x128xf32> to vector<1x5x128xf32>
    tpu.vector_store %arg3[%c1_12, %c0_13, %c0_14], %50 {strides = array<i32>} : memref<5x5x128xf32, #tpu.memory_space<vmem>>, vector<1x5x128xf32>,
    %51 = vector.extract_strided_slice %13 {offsets = [0, 0, 0], sizes = [1, 5, 128], strides = [1, 1, 1]} : vector<3x5x128xf32> to vector<1x5x128xf32>
    %52 = vector.shape_cast %51 : vector<1x5x128xf32> to vector<5x128xf32>
    %53 = vector.extract_strided_slice %24 {offsets = [1, 0, 0], sizes = [1, 5, 128], strides = [1, 1, 1]} : vector<3x5x128xf32> to vector<1x5x128xf32>
    %54 = vector.shape_cast %53 : vector<1x5x128xf32> to vector<5x128xf32>
    %55 = arith.addf %52, %54 : vector<5x128xf32>
    %56 = vector.extract_strided_slice %35 {offsets = [2, 0, 0], sizes = [1, 5, 128], strides = [1, 1, 1]} : vector<3x5x128xf32> to vector<1x5x128xf32>
    %57 = vector.shape_cast %56 : vector<1x5x128xf32> to vector<5x128xf32>
    %58 = arith.addf %55, %57 : vector<5x128xf32>
    %59 = math.tanh %58 : vector<5x128xf32>
    %c2_15 = arith.constant 2 : index
    %c0_16 = arith.constant 0 : index
    %c0_17 = arith.constant 0 : index
    %60 = vector.load %arg3[%c2_15, %c0_16, %c0_17] : memref<5x5x128xf32, #tpu.memory_space<vmem>>, vector<1x5x128xf32>
    %61 = vector.shape_cast %60 : vector<1x5x128xf32> to vector<5x128xf32>
    %62 = vector.shape_cast %59 : vector<5x128xf32> to vector<1x5x128xf32>
    tpu.vector_store %arg3[%c2_15, %c0_16, %c0_17], %62 {strides = array<i32>} : memref<5x5x128xf32, #tpu.memory_space<vmem>>, vector<1x5x128xf32>,
    %63 = vector.extract_strided_slice %13 {offsets = [1, 0, 0], sizes = [1, 5, 128], strides = [1, 1, 1]} : vector<3x5x128xf32> to vector<1x5x128xf32>
    %64 = vector.shape_cast %63 : vector<1x5x128xf32> to vector<5x128xf32>
    %65 = vector.extract_strided_slice %24 {offsets = [2, 0, 0], sizes = [1, 5, 128], strides = [1, 1, 1]} : vector<3x5x128xf32> to vector<1x5x128xf32>
    %66 = vector.shape_cast %65 : vector<1x5x128xf32> to vector<5x128xf32>
    %67 = arith.addf %64, %66 : vector<5x128xf32>
    %68 = math.tanh %67 : vector<5x128xf32>
    %c3_18 = arith.constant 3 : index
    %c0_19 = arith.constant 0 : index
    %c0_20 = arith.constant 0 : index
    %69 = vector.load %arg3[%c3_18, %c0_19, %c0_20] : memref<5x5x128xf32, #tpu.memory_space<vmem>>, vector<1x5x128xf32>
    %70 = vector.shape_cast %69 : vector<1x5x128xf32> to vector<5x128xf32>
    %71 = vector.shape_cast %68 : vector<5x128xf32> to vector<1x5x128xf32>
    tpu.vector_store %arg3[%c3_18, %c0_19, %c0_20], %71 {strides = array<i32>} : memref<5x5x128xf32, #tpu.memory_space<vmem>>, vector<1x5x128xf32>,
    %72 = vector.extract_strided_slice %13 {offsets = [2, 0, 0], sizes = [1, 5, 128], strides = [1, 1, 1]} : vector<3x5x128xf32> to vector<1x5x128xf32>
    %73 = vector.shape_cast %72 : vector<1x5x128xf32> to vector<5x128xf32>
    %74 = math.tanh %73 : vector<5x128xf32>
    %c4_21 = arith.constant 4 : index
    %c0_22 = arith.constant 0 : index
    %c0_23 = arith.constant 0 : index
    %75 = vector.load %arg3[%c4_21, %c0_22, %c0_23] : memref<5x5x128xf32, #tpu.memory_space<vmem>>, vector<1x5x128xf32>
    %76 = vector.shape_cast %75 : vector<1x5x128xf32> to vector<5x128xf32>
    %77 = vector.shape_cast %74 : vector<5x128xf32> to vector<1x5x128xf32>
    tpu.vector_store %arg3[%c4_21, %c0_22, %c0_23], %77 {strides = array<i32>} : memref<5x5x128xf32, #tpu.memory_space<vmem>>, vector<1x5x128xf32>,
    return
  }
  func.func @transform_0(%arg0: i32) -> (i32, i32, i32) {
    %c0_i32 = arith.constant 0 : i32
    %c0_i32_0 = arith.constant 0 : i32
    %c0_i32_1 = arith.constant 0 : i32
    return %c0_i32, %c0_i32_0, %arg0 : i32, i32, i32
  }
  func.func @transform_1(%arg0: i32) -> i32 {
    %c0_i32 = arith.constant 0 : i32
    %c0_i32_0 = arith.constant 0 : i32
    return %c0_i32 : i32
  }
  func.func @transform_2(%arg0: i32) -> (i32, i32, i32) {
    %c0_i32 = arith.constant 0 : i32
    %c0_i32_0 = arith.constant 0 : i32
    %c0_i32_1 = arith.constant 0 : i32
    return %c0_i32, %c0_i32_0, %arg0 : i32, i32, i32
  }
}

</mosaic_0001>

<llo_original>
// kernel: model_tanh_forward.1
$region0: #{model_tanh_forward.1}
  #allocation0 [shape = 'u32[]', space=smem, size = 0x4, offset = 0x4, fixed_abs, tag = 'smem constant byte address 0x4 - core index']
  #allocation1 [shape = 'u32[144,128]{1,0:T(1,128)}', space=vmem, size = 0x12000, scoped, tag = 'internal scratch']
  %s0 = inlined_call_operand.vmem [shape: f32[3,7,128], index: 0, kind: input, shape index: {}]
  %s1 = inlined_call_operand.vmem [shape: f32[9], index: 1, kind: input, shape index: {}]
  %s2 = inlined_call_operand.vmem [shape: f32[5,5,128], index: 2, kind: output, shape index: {}]
  %s3 = sld [smem:[#allocation0]]
  $region22: #{model_tanh_forward.1} parent=0
    _
  %s5 = ssub.s32 1, %s3
  %s6 = scalar_select 0, %s5, %s3
  $region1: #{model_tanh_forward.1} parent=0
    #allocation2 [shape = 'u8[512]{0}', space=smem, size = 0x200, scoped, tag = 'input window, operand 1, single buffered']
    #allocation3 [shape = 's32[1]{0}', space=sflag, size = 0x4, scoped, tag = 'scoped memory for model_tanh_forward.1']
    %7 = vsyncpa [#allocation3], 0
    // Predicated region
    $region2: #{model_tanh_forward.1} parent=1 // pred_check
      _
    $region3: #{model_tanh_forward.1} parent=1 // pred_check_branch
      %9 = sbr.rel (0) target = $region5
    $region4: #{model_tanh_forward.1} parent=1 // pred_region
      _
    $region5: #{model_tanh_forward.1} parent=1 // pred_fallthru
      _
    // Predicated region
    $region6: #{model_tanh_forward.1} parent=1 // pred_check
      _
    $region7: #{model_tanh_forward.1} parent=1 // pred_check_branch
      %11 = sbr.rel (0) target = $region9
    $region8: #{model_tanh_forward.1} parent=1 // pred_region
      %s13 = ssub.s32 16, 16
      %14 = vsyncadd [#allocation3], %s13
      %s16 = sshll.u32 %s1, 4
      %s17 = int_to_ptr.vmem [resolvable:$true] %s16
      %19 = dma.vmem_to_smem %s17, 16, [#allocation2], [#allocation3]
    $region9: #{model_tanh_forward.1} parent=1 // pred_fallthru
      _
    // Predicated region
    $region10: #{model_tanh_forward.1} parent=1 // pred_check
      _
    $region11: #{model_tanh_forward.1} parent=1 // pred_check_branch
      %21 = sbr.rel (0) target = $region13
    $region12: #{model_tanh_forward.1} parent=1 // pred_region
      %22 = dma.done [#allocation3], 16
    $region13: #{model_tanh_forward.1} parent=1 // pred_fallthru
      _
    %23 = sfence
    %v24 = vld [vmem:[%s0] sm:$0x1f]
    %v25 = vld [vmem:[%s0 + $0x8] sm:$0x1f]
    %v26 = vld [vmem:[%s0 + $0x10] sm:$0x1f]
    %v27 = vld [vmem:[%s0 + $0x1] sm:$0x1f]
    %v28 = vld [vmem:[%s0 + $0x9] sm:$0x1f]
    %v29 = vld [vmem:[%s0 + $0x11] sm:$0x1f]
    %v30 = vld [vmem:[%s0 + $0x2] sm:$0x1f]
    %v31 = vld [vmem:[%s0 + $0xa] sm:$0x1f]
    %v32 = vld [vmem:[%s0 + $0x12] sm:$0x1f]
    %s33 = sld [smem:[#allocation2]]
    %v34 = vstv %s33
    %v35 = vmul.f32 %v34, %v24
    %v36 = vmul.f32 %v34, %v25
    %v37 = vmul.f32 %v34, %v26
    %s38 = sld [smem:[#allocation2 + $0x1]]
    %v39 = vstv %s38
    %v40 = vmul.f32 %v39, %v27
    %v41 = vmul.f32 %v39, %v28
    %v42 = vmul.f32 %v39, %v29
    %v43 = vadd.f32 %v35, %v40
    %v44 = vadd.f32 %v36, %v41
    %v45 = vadd.f32 %v37, %v42
    %s46 = sld [smem:[#allocation2 + $0x2]]
    %v47 = vstv %s46
    %v48 = vmul.f32 %v47, %v30
    %v49 = vmul.f32 %v47, %v31
    %v50 = vmul.f32 %v47, %v32
    %v51 = vadd.f32 %v43, %v48
    %v52 = vadd.f32 %v44, %v49
    %v53 = vadd.f32 %v45, %v50
    %s54 = sld [smem:[#allocation2 + $0x3]]
    %v55 = vstv %s54
    %v56 = vmul.f32 %v55, %v24
    %v57 = vmul.f32 %v55, %v25
    %v58 = vmul.f32 %v55, %v26
    %s59 = sld [smem:[#allocation2 + $0x4]]
    %v60 = vstv %s59
    %v61 = vmul.f32 %v60, %v27
    %v62 = vmul.f32 %v60, %v28
    %v63 = vmul.f32 %v60, %v29
    %v64 = vadd.f32 %v56, %v61
    %v65 = vadd.f32 %v57, %v62
    %v66 = vadd.f32 %v58, %v63
    %s67 = sld [smem:[#allocation2 + $0x5]]
    %v68 = vstv %s67
    %v69 = vmul.f32 %v68, %v30
    %v70 = vmul.f32 %v68, %v31
    %v71 = vmul.f32 %v68, %v32
    %v72 = vadd.f32 %v64, %v69
    %v73 = vadd.f32 %v65, %v70
    %v74 = vadd.f32 %v66, %v71
    %s75 = sld [smem:[#allocation2 + $0x6]]
    %v76 = vstv %s75
    %v77 = vmul.f32 %v76, %v24
    %v78 = vmul.f32 %v76, %v25
    %v79 = vmul.f32 %v76, %v26
    %s80 = sld [smem:[#allocation2 + $0x7]]
    %v81 = vstv %s80
    %v82 = vmul.f32 %v81, %v27
    %v83 = vmul.f32 %v81, %v28
    %v84 = vmul.f32 %v81, %v29
    %v85 = vadd.f32 %v77, %v82
    %v86 = vadd.f32 %v78, %v83
    %v87 = vadd.f32 %v79, %v84
    %s88 = sld [smem:[#allocation2 + $0x8]]
    %v89 = vstv %s88
    %v90 = vmul.f32 %v89, %v30
    %v91 = vmul.f32 %v89, %v31
    %v92 = vmul.f32 %v89, %v32
    %v93 = vadd.f32 %v85, %v90
    %v94 = vadd.f32 %v86, %v91
    %v95 = vadd.f32 %v87, %v92
    %v96 = vtanh.pop %v93
    %97 = vst [vmem:[%s2] sm:$0x1f] %v96
    %v98 = vadd.f32 %v72, %v94
    %v99 = vtanh.pop %v98
    %s100 = scalar_lea.vmem %s2, 8
    %101 = vst [vmem:[%s100] sm:$0x1f] %v99
    %v102 = vadd.f32 %v51, %v73
    %v103 = vadd.f32 %v102, %v95
    %v104 = vtanh.pop %v103
    %s105 = scalar_lea.vmem %s2, 16
    %106 = vst [vmem:[%s105] sm:$0x1f] %v104
    %v107 = vadd.f32 %v52, %v74
    %v108 = vtanh.pop %v107
    %s109 = scalar_lea.vmem %s2, 24
    %110 = vst [vmem:[%s109] sm:$0x1f] %v108
    %v111 = vtanh.pop %v53
    %s112 = scalar_lea.vmem %s2, 32
    %113 = vst [vmem:[%s112] sm:$0x1f] %v111
    // Predicated region
    $region14: #{model_tanh_forward.1} parent=1 // pred_check
      _
    $region15: #{model_tanh_forward.1} parent=1 // pred_check_branch
      %115 = sbr.rel (0) target = $region17
    $region16: #{model_tanh_forward.1} parent=1 // pred_region
      _
    $region17: #{model_tanh_forward.1} parent=1 // pred_fallthru
      _
    // Predicated region
    $region18: #{model_tanh_forward.1} parent=1 // pred_check
      _
    $region19: #{model_tanh_forward.1} parent=1 // pred_check_branch
      %117 = sbr.rel (0) target = $region21
    $region20: #{model_tanh_forward.1} parent=1 // pred_region
      _
    $region21: #{model_tanh_forward.1} parent=1 // pred_fallthru
      _
    %118 = vsyncpa [#allocation3], 1

</llo_original>
